<compile_context>
chip_gen: v5e
topology: v5e:2x2
jax: 0.10.0
libtpu: 0.0.40
codegen_flags: <defaults>
</compile_context>

<pallas_src>
import jax
import jax.numpy as jnp
import numpy as np
from jax import lax
from jax.experimental import pallas as pl
from jax.experimental.pallas import tpu as pltpu


# ----------------------------- Pallas kernel --------------------------------
def conv_bn_mish_kernel(w_ref, xt_ref, shift_ref, o_ref):
    # GEMM on the MXU: (Cout, K) @ (K, block_m) -> (Cout, block_m), f32 accum.
    acc = jnp.dot(w_ref[...], xt_ref[...], preferred_element_type=jnp.float32)
    # Folded BatchNorm: scale is already folded into the weights, add shift.
    y = acc + shift_ref[...]
    # Mish: y * tanh(softplus(y)).  With e = exp(y):
    #   tanh(log(1 + e)) = (e^2 + 2e) / (e^2 + 2e + 2)
    # -> one EUP exp + one approx reciprocal instead of exp + log1p + tanh.
    e = jnp.exp(jnp.minimum(y, 20.0))
    num = e * (e + 2.0)
    t = num * pl.reciprocal(num + 2.0, approx=True)
    o_ref[...] = (y * jnp.where(y > 20.0, 1.0, t)).astype(o_ref.dtype)


def _fused_gemm_bn_mish(w_folded, patches_t, shift, *, block_m):
    """w_folded: (Cout, K) bf16, patches_t: (K, M) bf16, shift: (Cout, 1) f32."""
    Cout, K = w_folded.shape
    _, M = patches_t.shape
    block_m = min(block_m, M)
    grid = (pl.cdiv(M, block_m),)

    cost = pl.CostEstimate(
        flops=2 * M * K * Cout,
        transcendentals=M * Cout,
        bytes_accessed=(M * K * patches_t.dtype.itemsize
                        + Cout * K * w_folded.dtype.itemsize
                        + Cout * shift.dtype.itemsize
                        + M * Cout * 4),
    )

    return pl.pallas_call(
        conv_bn_mish_kernel,
        out_shape=jax.ShapeDtypeStruct((Cout, M), jnp.float32),
        grid=grid,
        in_specs=[
            pl.BlockSpec((Cout, K), lambda i: (0, 0)),      # weights (resident)
            pl.BlockSpec((K, block_m), lambda i: (0, i)),   # stream M tiles
            pl.BlockSpec((Cout, 1), lambda i: (0, 0)),      # BN shift (resident)
        ],
        out_specs=pl.BlockSpec((Cout, block_m), lambda i: (0, i)),
        compiler_params=pltpu.CompilerParams(
            dimension_semantics=("parallel",),              # megacore on v7x
            vmem_limit_bytes=32 * 1024 * 1024,              # safe for v7x (64 MiB phys)
        ),
        cost_estimate=cost,
    )(w_folded, patches_t, shift)


# ------------------------------ JAX glue -------------------------------------
def _im2col_kxm(x, k, stride):
    """x: (N, C, H, W) -> patches^T of shape (C*k*k, N*Ho*Wo).

    Row order is (c, kh, kw) to match weight.reshape(Cout, C*k*k); column order
    is (n, ho, wo) so the (Cout, M) GEMM output un-flattens to (Cout, N, Ho, Wo)
    with a reshape + leading-dim permute only.
    """
    N, C, H, W = x.shape
    pad = k // 2
    xp = jnp.pad(x, ((0, 0), (0, 0), (pad, pad), (pad, pad)))
    Ho = (H + 2 * pad - k) // stride + 1
    Wo = (W + 2 * pad - k) // stride + 1
    cols = []
    for i in range(k):
        for j in range(k):
            cols.append(xp[:, :, i:i + stride * Ho:stride, j:j + stride * Wo:stride])
    p = jnp.stack(cols, axis=2)                      # (N, C, k*k, Ho, Wo)
    p = p.reshape(N, C * k * k, Ho, Wo)              # row idx = c*k*k + kh*k + kw
    p = p.transpose(1, 0, 2, 3).reshape(C * k * k, N * Ho * Wo)
    return p, Ho, Wo


def conv_bn_activation(x_nchw, weight, gamma, beta, running_mean, running_var,
                       *, stride=1, eps=1e-5, block_m=256):
    """Equivalent of ConvBnActivation(in, out, k, stride, 'mish', bn=True, bias=False).

    x_nchw : (N, Cin, H, W)
    weight : (Cout, Cin, k, k)   -- PyTorch Conv2d weight layout
    block_m: M-tile (output lane dim); multiple of 128. Sweep 512-2048 for
             large N*H*W; 256 keeps the demo shape multi-tile (pipelined).
    returns: (N, Cout, Ho, Wo) float32
    """
    Cout, Cin, k, _ = weight.shape
    N = x_nchw.shape[0]

    patches_t, Ho, Wo = _im2col_kxm(x_nchw, k, stride)           # (K, M) f32

    inv_std = 1.0 / jnp.sqrt(running_var + eps)
    scale = gamma * inv_std                                      # (Cout,)
    shift = (beta - running_mean * scale).reshape(Cout, 1)       # (Cout, 1)
    w_folded = weight.reshape(Cout, Cin * k * k) * scale[:, None]

    out = _fused_gemm_bn_mish(
        w_folded.astype(jnp.bfloat16),
        patches_t.astype(jnp.bfloat16),
        shift.astype(jnp.float32),
        block_m=block_m,
    )                                                            # (Cout, M) f32
    out = out.reshape(Cout, N, Ho, Wo).transpose(1, 0, 2, 3)     # leading-dim permute
    return out


# ------------------------------ reference ------------------------------------
def _reference(x, weight, gamma, beta, rm, rv, *, stride=1, eps=1e-5):
    y = lax.conv_general_dilated(
        x, weight, window_strides=(stride, stride),
        padding=[(weight.shape[2] // 2, weight.shape[2] // 2)] * 2,
        dimension_numbers=("NCHW", "OIHW", "NCHW"))
    inv = 1.0 / jnp.sqrt(rv + eps)
    y = (y - rm[None, :, None, None]) * (gamma * inv)[None, :, None, None] \
        + beta[None, :, None, None]
    return y * jnp.tanh(jax.nn.softplus(y))


if __name__ == "__main__":
    key = jax.random.PRNGKey(0)
    k_x, k_w, k_g, k_b, k_m, k_v = jax.random.split(key, 6)

    N, Cin, H, W = 2, 4, 16, 16
    Cout, ksz, stride = 8, 3, 1

    x = jax.random.normal(k_x, (N, Cin, H, W), dtype=jnp.float32)
    weight = jax.random.normal(k_w, (Cout, Cin, ksz, ksz), dtype=jnp.float32) * 0.1
    gamma = 1.0 + 0.1 * jax.random.normal(k_g, (Cout,), dtype=jnp.float32)
    beta = 0.1 * jax.random.normal(k_b, (Cout,), dtype=jnp.float32)
    running_mean = 0.05 * jax.random.normal(k_m, (Cout,), dtype=jnp.float32)
    running_var = 1.0 + 0.1 * jax.random.uniform(k_v, (Cout,), dtype=jnp.float32)

    out = conv_bn_activation(x, weight, gamma, beta, running_mean, running_var,
                             stride=stride)
    out = jax.block_until_ready(out)

    ref = _reference(x, weight, gamma, beta, running_mean, running_var,
                     stride=stride)
    # bf16 MXU operands (f32 accumulation) => loosened tolerance vs f32 reference.
    np.testing.assert_allclose(np.asarray(out), np.asarray(ref),
                               rtol=3e-2, atol=3e-2)

    print("KERNEL_OK")
</pallas_src>

<mosaic_0001>
module attributes {stable_mosaic.version = 11 : i64} {
  func.func @conv_bn_mish_kernel(%arg0: i32, %arg1: memref<8x36xbf16, #tpu.memory_space<vmem>>, %arg2: memref<36x256xbf16, #tpu.memory_space<vmem>>, %arg3: memref<8x1xf32, #tpu.memory_space<vmem>>, %arg4: memref<8x256xf32, #tpu.memory_space<vmem>>) attributes {dimension_semantics = [#tpu.dimension_semantics<parallel>], iteration_bounds = array<i64: 2>, scalar_prefetch = 0 : i64, scratch_operands = 0 : i64, tpu.core_type = #tpu.core_type<tc>, window_params = [{pipeline_mode = #tpu.pipeline_mode<synchronous>, transform_indices = @transform_0, window_bounds = array<i64: 8, 36>}, {transform_indices = @transform_1, window_bounds = array<i64: 36, 256>}, {pipeline_mode = #tpu.pipeline_mode<synchronous>, transform_indices = @transform_2, window_bounds = array<i64: 8, 1>}, {transform_indices = @transform_3, window_bounds = array<i64: 8, 256>}]} {
    %c0 = arith.constant 0 : index
    %c0_0 = arith.constant 0 : index
    %0 = vector.load %arg1[%c0, %c0_0] : memref<8x36xbf16, #tpu.memory_space<vmem>>, vector<8x36xbf16>
    %c0_1 = arith.constant 0 : index
    %c0_2 = arith.constant 0 : index
    %1 = vector.load %arg2[%c0_1, %c0_2] : memref<36x256xbf16, #tpu.memory_space<vmem>>, vector<36x256xbf16>
    %cst = arith.constant dense<0.000000e+00> : vector<8x256xf32>
    %2 = tpu.matmul %0, %1, %cst {dimension_numbers = #tpu.dot_dimension_numbers<[1], [0], [0], [1], [0, 0, 1, 1], [], []>} : vector<8x36xbf16>, vector<36x256xbf16>, vector<8x256xf32> -> vector<8x256xf32>
    %c0_3 = arith.constant 0 : index
    %c0_4 = arith.constant 0 : index
    %3 = vector.load %arg3[%c0_3, %c0_4] : memref<8x1xf32, #tpu.memory_space<vmem>>, vector<8x1xf32>
    %4 = vector.broadcast %3 : vector<8x1xf32> to vector<8x256xf32>
    %5 = arith.addf %2, %4 : vector<8x256xf32>
    %cst_5 = arith.constant 2.000000e+01 : f32
    %6 = vector.broadcast %cst_5 : f32 to vector<8x256xf32>
    %7 = arith.minimumf %5, %6 : vector<8x256xf32>
    %8 = math.exp %7 : vector<8x256xf32>
    %cst_6 = arith.constant 2.000000e+00 : f32
    %9 = vector.broadcast %cst_6 : f32 to vector<8x256xf32>
    %10 = arith.addf %8, %9 : vector<8x256xf32>
    %11 = arith.mulf %8, %10 : vector<8x256xf32>
    %cst_7 = arith.constant 2.000000e+00 : f32
    %12 = vector.broadcast %cst_7 : f32 to vector<8x256xf32>
    %13 = arith.addf %11, %12 : vector<8x256xf32>
    %14 = tpu.reciprocal %13 {approx = true} : vector<8x256xf32> -> vector<8x256xf32>
    %15 = arith.mulf %11, %14 : vector<8x256xf32>
    %cst_8 = arith.constant 2.000000e+01 : f32
    %16 = vector.broadcast %cst_8 : f32 to vector<8x256xf32>
    %17 = arith.cmpf ogt, %5, %16 : vector<8x256xf32>
    %cst_9 = arith.constant 1.000000e+00 : f32
    %18 = vector.broadcast %cst_9 : f32 to vector<8x256xf32>
    %19 = arith.select %17, %18, %15 : vector<8x256xi1>, vector<8x256xf32>
    %20 = arith.mulf %5, %19 : vector<8x256xf32>
    %c0_10 = arith.constant 0 : index
    %c0_11 = arith.constant 0 : index
    %21 = vector.load %arg4[%c0_10, %c0_11] : memref<8x256xf32, #tpu.memory_space<vmem>>, vector<8x256xf32>
    tpu.vector_store %arg4[%c0_10, %c0_11], %20 {strides = array<i32>} : memref<8x256xf32, #tpu.memory_space<vmem>>, vector<8x256xf32>,
    return
  }
  func.func @transform_0(%arg0: i32) -> (i32, i32) {
    %c0_i32 = arith.constant 0 : i32
    %c0_i32_0 = arith.constant 0 : i32
    %c0_i32_1 = arith.constant 0 : i32
    return %c0_i32, %c0_i32_0 : i32, i32
  }
  func.func @transform_1(%arg0: i32) -> (i32, i32) {
    %c0_i32 = arith.constant 0 : i32
    %c0_i32_0 = arith.constant 0 : i32
    return %c0_i32, %arg0 : i32, i32
  }
  func.func @transform_2(%arg0: i32) -> (i32, i32) {
    %c0_i32 = arith.constant 0 : i32
    %c0_i32_0 = arith.constant 0 : i32
    %c0_i32_1 = arith.constant 0 : i32
    return %c0_i32, %c0_i32_0 : i32, i32
  }
  func.func @transform_3(%arg0: i32) -> (i32, i32) {
    %c0_i32 = arith.constant 0 : i32
    %c0_i32_0 = arith.constant 0 : i32
    return %c0_i32, %arg0 : i32, i32
  }
}

</mosaic_0001>

<llo_original>
// kernel: tpu_custom_call.1
$region0: #{tpu_custom_call.1}
  #allocation0 [shape = 'u32[]', space=smem, size = 0x4, offset = 0x4, fixed_abs, tag = 'smem constant byte address 0x4 - core index']
  #allocation1 [shape = 'u32[72,128]{1,0:T(1,128)}', space=vmem, size = 0x9000, scoped, tag = 'internal scratch']
  %s0 = inlined_call_operand.vmem [shape: bf16[8,36], index: 0, kind: input, shape index: {}]
  %s1 = inlined_call_operand.hbm [shape: bf16[36,512], index: 1, kind: input, shape index: {}]
  %s2 = inlined_call_operand.vmem [shape: f32[8,1], index: 2, kind: input, shape index: {}]
  %s3 = inlined_call_operand.hbm [shape: f32[8,512], index: 3, kind: output, shape index: {}]
  %s4 = sld [smem:[#allocation0]]
  $region49: #{tpu_custom_call.1} parent=0
    _
  %s6 = ssub.s32 1, %s4
  %s7 = scalar_select 0, %s6, %s4
  $region1: #{tpu_custom_call.1} parent=0
    #allocation2 [shape = 'u8[40960]{0}', space=vmem, size = 0xa000, scoped, tag = 'input window, operand 1']
    #allocation3 [shape = 's32[2]{0}', space=sflag, size = 0x8, scoped, tag = 'scoped memory for tpu_custom_call.1']
    #allocation4 [shape = 's32[2]{0}', space=sflag, size = 0x8, scoped, tag = 'scoped memory for tpu_custom_call.1']
    #allocation5 [shape = 'u8[16384]{0}', space=vmem, size = 0x4000, scoped, tag = 'output window, operand 0']
    %8 = vsyncpa [#allocation3], 0
    %s9 = scalar_lea.sflag [#allocation3], 1
    %10 = vsyncpa %s9, 0
    %11 = vsyncpa [#allocation4], 0
    %s12 = scalar_lea.sflag [#allocation4], 1
    %13 = vsyncpa %s12, 0
    loop: start=0, step=1, limit=4
    $region2: #{tpu_custom_call.1} parent=1 // loop_pre_header
      _
    $region3: #{tpu_custom_call.1} parent=1 // loop_header
      %s15 = sphi 0, %s19
      %p16 = scmp.ge.s32.totalorder %s15, 4
      %s23 = sphi 0, %s23
      %s25 = sphi 0, %s23
      %s26 = sphi 0, %s25
      %s40 = sphi 0, %s26
      %s46 = sphi 0, %s48
      %s49 = sphi 0, %s46
      %s50 = sphi 0, %s49
      %s66 = sphi 0, %s50
      %s70 = sphi 0, %s70
      %s72 = sphi 0, %s70
      %s73 = sphi 0, %s72
      %s87 = sphi 0, %s73
      %s93 = sphi 0, %s95
      %s96 = sphi 0, %s93
      %s97 = sphi 0, %s96
      %s113 = sphi 0, %s97
    $region4: #{tpu_custom_call.1} parent=1 // loop_header_branch
      %18 = sbr.rel (%p16) target = $region8
    $region5: #{tpu_custom_call.1} parent=1 // loop_body
      %s20 = ssub.s32 %s15, 1
      %s21 = ssub.s32 %s15, 2
      %s22 = sadd.s32 %s15, 1
      %s24 = sadd.s32 %s23, 1
      %p27 = scmp.eq.s32.totalorder %s15, 1
      %p28 = scmp.ne.s32.totalorder %s23, %s25
      %p29 = scmp.eq.s32.totalorder %s15, 0
      %p30 = por %p28, %p29
      %p31 = scmp.ne.s32.totalorder %s23, %s25
      %p32 = scmp.eq.s32.totalorder %s20, 1
      %p33 = por %p31, %p32
      %p34 = scmp.ne.s32.totalorder %s25, %s26
      %p35 = scmp.eq.s32.totalorder %s20, 0
      %p36 = por %p34, %p35
      %p37 = scmp.ne.s32.totalorder %s25, %s26
      %p38 = scmp.eq.s32.totalorder %s21, 1
      %p39 = por %p37, %p38
      %p41 = scmp.ne.s32.totalorder %s26, %s40
      %p42 = scmp.eq.s32.totalorder %s21, 0
      %p43 = por %p41, %p42
      %s44 = ssub.s32 %s15, %s22
      %p45 = scmp.eq.s32.totalorder %s44, 0
      %s47 = sadd.s32 %s46, 1
      %s48 = scalar_select %p45, %s46, %s47
      %p51 = pneg %p45
      %p52 = scmp.eq.s32.totalorder %s15, 1
      %p53 = por %p51, %p52
      %p54 = scmp.ne.s32.totalorder %s46, %s49
      %p55 = scmp.eq.s32.totalorder %s15, 0
      %p56 = por %p54, %p55
      %p57 = scmp.ne.s32.totalorder %s46, %s49
      %p58 = scmp.eq.s32.totalorder %s20, 1
      %p59 = por %p57, %p58
      %p60 = scmp.ne.s32.totalorder %s49, %s50
      %p61 = scmp.eq.s32.totalorder %s20, 0
      %p62 = por %p60, %p61
      %p63 = scmp.ne.s32.totalorder %s49, %s50
      %p64 = scmp.eq.s32.totalorder %s21, 1
      %p65 = por %p63, %p64
      %p67 = scmp.ne.s32.totalorder %s50, %s66
      %p68 = scmp.eq.s32.totalorder %s21, 0
      %p69 = por %p67, %p68
      %s71 = sadd.s32 %s70, 1
      %p74 = scmp.eq.s32.totalorder %s15, 1
      %p75 = scmp.ne.s32.totalorder %s70, %s72
      %p76 = scmp.eq.s32.totalorder %s15, 0
      %p77 = por %p75, %p76
      %p78 = scmp.ne.s32.totalorder %s70, %s72
      %p79 = scmp.eq.s32.totalorder %s20, 1
      %p80 = por %p78, %p79
      %p81 = scmp.ne.s32.totalorder %s72, %s73
      %p82 = scmp.eq.s32.totalorder %s20, 0
      %p83 = por %p81, %p82
      %p84 = scmp.ne.s32.totalorder %s72, %s73
      %p85 = scmp.eq.s32.totalorder %s21, 1
      %p86 = por %p84, %p85
      %p88 = scmp.ne.s32.totalorder %s73, %s87
      %p89 = scmp.eq.s32.totalorder %s21, 0
      %p90 = por %p88, %p89
      %s91 = ssub.s32 %s15, %s22
      %p92 = scmp.eq.s32.totalorder %s91, 0
      %s94 = sadd.s32 %s93, 1
      %s95 = scalar_select %p92, %s93, %s94
      %p98 = pneg %p92
      %p99 = scmp.eq.s32.totalorder %s15, 1
      %p100 = por %p98, %p99
      %p101 = scmp.ne.s32.totalorder %s93, %s96
      %p102 = scmp.eq.s32.totalorder %s15, 0
      %p103 = por %p101, %p102
      %p104 = scmp.ne.s32.totalorder %s93, %s96
      %p105 = scmp.eq.s32.totalorder %s20, 1
      %p106 = por %p104, %p105
      %p107 = scmp.ne.s32.totalorder %s96, %s97
      %p108 = scmp.eq.s32.totalorder %s20, 0
      %p109 = por %p107, %p108
      %p110 = scmp.ne.s32.totalorder %s96, %s97
      %p111 = scmp.eq.s32.totalorder %s21, 1
      %p112 = por %p110, %p111
      %p114 = scmp.ne.s32.totalorder %s97, %s113
      %p115 = scmp.eq.s32.totalorder %s21, 0
      %p116 = por %p114, %p115
      %p117 = scmp.le.s32.totalorder 1, %s15
      %p118 = scmp.lt.s32.totalorder %s15, 3
      %p119 = pnand %p117, %p118
      %p120 = pneg %p119
      // Predicated region
      $region9: #{tpu_custom_call.1} parent=5 // pred_check
        _
      $region10: #{tpu_custom_call.1} parent=5 // pred_check_branch
        %122 = sbr.rel (%p119) target = $region12
      $region11: #{tpu_custom_call.1} parent=5 // pred_region
        %s123 = ssub.s32 %s15, 1
        // Predicated region
        $region13: #{tpu_custom_call.1} parent=11 // pred_check
          %p124 = pneg %p36
        $region14: #{tpu_custom_call.1} parent=11 // pred_check_branch
          %126 = sbr.rel (%p124) target = $region16
        $region15: #{tpu_custom_call.1} parent=11 // pred_region
          _
        $region16: #{tpu_custom_call.1} parent=11 // pred_fallthru
          _
        // Predicated region
        $region17: #{tpu_custom_call.1} parent=11 // pred_check
          %p127 = pneg %p83
        $region18: #{tpu_custom_call.1} parent=11 // pred_check_branch
          %129 = sbr.rel (%p127) target = $region20
        $region19: #{tpu_custom_call.1} parent=11 // pred_region
          _
        $region20: #{tpu_custom_call.1} parent=11 // pred_fallthru
          _
      $region12: #{tpu_custom_call.1} parent=5 // pred_fallthru
        _
      %p130 = scmp.lt.s32.totalorder %s15, 2
      // Predicated region
      $region21: #{tpu_custom_call.1} parent=5 // pred_check
        %p131 = pneg %p130
      $region22: #{tpu_custom_call.1} parent=5 // pred_check_branch
        %133 = sbr.rel (%p131) target = $region24
      $region23: #{tpu_custom_call.1} parent=5 // pred_region
        // Predicated region
        $region25: #{tpu_custom_call.1} parent=23 // pred_check
          %p134 = pneg %p56
        $region26: #{tpu_custom_call.1} parent=23 // pred_check_branch
          %136 = sbr.rel (%p134) target = $region28
        $region27: #{tpu_custom_call.1} parent=23 // pred_region
          %s137 = sand.u32 %s46, 1
          %s138 = scalar_lea.sflag [#allocation3], %s137
          %s139 = sand.u32 %s46, 1
          %s140 = smul.addr %s139, 40
          %s141 = scalar_lea.vmem [#allocation2], %s140
          %s142 = smul.u32 2, %s15
          %144 = vsyncadd %s138, 0
          %s145 = smul.addr %s142, 4
          %s146 = scalar_lea.hbm %s1, %s145
          %s147 = sshll.u32 %s146, 4
          %s148 = int_to_ptr.hbm [resolvable:$true] %s147
          %s149 = sshll.u32 %s141, 4
          %s150 = int_to_ptr.vmem [resolvable:$true] %s149
          %155 = dma.hbm_to_vmem [thread:$0]  %s148, 640, %s150, %s138, 256, 128, 8
        $region28: #{tpu_custom_call.1} parent=23 // pred_fallthru
          _
      $region24: #{tpu_custom_call.1} parent=5 // pred_fallthru
        _
      %p156 = scmp.le.s32.totalorder 1, %s15
      %p157 = scmp.lt.s32.totalorder %s15, 3
      %p158 = pnand %p156, %p157
      %p159 = pneg %p158
      // Predicated region
      $region29: #{tpu_custom_call.1} parent=5 // pred_check
        _
      $region30: #{tpu_custom_call.1} parent=5 // pred_check_branch
        %161 = sbr.rel (%p158) target = $region32
      $region31: #{tpu_custom_call.1} parent=5 // pred_region
        %s162 = ssub.s32 %s15, 1
        %s163 = sand.u32 %s49, 1
        %s164 = scalar_lea.sflag [#allocation3], %s163
        %s165 = sand.u32 %s49, 1
        %s166 = smul.addr %s165, 40
        %s167 = scalar_lea.vmem [#allocation2], %s166
        // Predicated region
        $region33: #{tpu_custom_call.1} parent=31 // pred_check
          %p168 = pneg %p62
        $region34: #{tpu_custom_call.1} parent=31 // pred_check_branch
          %170 = sbr.rel (%p168) target = $region36
        $region35: #{tpu_custom_call.1} parent=31 // pred_region
          %172 = dma.done %s164, 640
        $region36: #{tpu_custom_call.1} parent=31 // pred_fallthru
          _
        %p173 = pneg %p36
        %p174 = pneg %p33
        %s175 = sand.u32 %s49, 1
        %s176 = scalar_lea.sflag [#allocation3], %s175
        %s177 = sand.u32 %s49, 1
        %s178 = smul.addr %s177, 40
        %s179 = scalar_lea.vmem [#allocation2], %s178
        %p180 = pneg %p62
        %p181 = pneg %p59
        %p182 = pneg %p83
        %p183 = pneg %p80
        %p184 = pneg %p109
        %p185 = pneg %p106
        %s186 = sand.u32 %s96, 1
        %s187 = scalar_lea.sflag [#allocation4], %s186
        %s188 = sand.u32 %s96, 1
        %s189 = smul.addr %s188, 16
        %s190 = scalar_lea.vmem [#allocation5], %s189
        %s191 = smul.u32 2, %s20
        %s192 = smul.u32 2, %s20
        %v194 = vld [vmem:[%s0] sm:$0xf]
        %v195 = vld [vmem:[%s167] sm:$0xff]
        %v196 = vld [vmem:[%s167 + $0x8] sm:$0xff]
        %v197 = vld [vmem:[%s167 + $0x10] sm:$0xff]
        %v198 = vld [vmem:[%s167 + $0x18] sm:$0xff]
        %v199 = vld [vmem:[%s167 + $0x20] sm:$0x33]
        %v200 = vld [vmem:[%s2] sm:$0xff]
        %202 = vset.pattern.permute.xlu0 0
        %203 = vperm.xlu0 %202, %v200
        %v204 = vpop.permute.xlu0 %203
        %v211 = vunpack.c.l.b16 %v195
        %v212 = vunpack.c.h.b16 %v195
        %v213 = vunpack.c.l.b16 %v196
        %v214 = vunpack.c.h.b16 %v196
        %v215 = vunpack.c.l.b16 %v197
        %v216 = vunpack.c.h.b16 %v197
        %v217 = vunpack.c.l.b16 %v198
        %v218 = vunpack.c.h.b16 %v198
        %v219 = vunpack.c.l.b16 %v199
        %v220 = vunpack.c.h.b16 %v199
        %v221 = vpack.c.b16 %v213, %v211
        %v222 = vpack.c.b16 %v214, %v212
        %v223 = vpack.c.b16 %v217, %v215
        %v224 = vpack.c.b16 %v218, %v216
        %v225 = vpack.c.b16 %v219, %v219
        %v226 = vpack.c.b16 %v220, %v220
        %vm231 = vcmask 293888
        %v233 = vsel %vm231, %v194, 0
        %vm235 = vcmask 1041408
        %v237 = vsel %vm235, %v225, 0
        %v240 = vsel %vm235, %v226, 0
        %242 = vmatpush.bf16.msra.mxu0 0
        %243 = vmatpush.bf16.msra.mxu0 0
        %244 = vmatpush.bf16.msra.mxu0 0
        %245 = vmatpush.bf16.msra.mxu0 0
        %246 = vmatpush.bf16.msra.mxu0 0
        %247 = vmatpush.bf16.msra.mxu0 %v237
        %248 = vmatpush.bf16.msra.mxu0 %v223
        %249 = vmatpush.bf16.msra.mxu0 %v221
        %250 = vmatmul.bf16.gmra.mxu0 %v233
        %v251 = vpop.f32.mrf.mxu0
        %v252 = vadd.f32 %v204, %v251
        %v253 = vpop.f32.mrf.mxu0
        %254 = vdwg.mxu0
        %255 = vmatpush.bf16.msra.mxu0 0
        %256 = vmatpush.bf16.msra.mxu0 0
        %257 = vmatpush.bf16.msra.mxu0 0
        %258 = vmatpush.bf16.msra.mxu0 0
        %259 = vmatpush.bf16.msra.mxu0 0
        %260 = vmatpush.bf16.msra.mxu0 %v240
        %261 = vmatpush.bf16.msra.mxu0 %v224
        %262 = vmatpush.bf16.msra.mxu0 %v222
        %263 = vmatmul.bf16.gmra.mxu0 %v233
        %v264 = vpop.f32.mrf.mxu0
        %v265 = vadd.f32 %v204, %v264
        %v266 = vpop.f32.mrf.mxu0
        %267 = vdwg.mxu0
        %v268 = vmin.f32 %v252, 20.0
        %v269 = vmin.f32 %v265, 20.0
        %v270 = vmul.f32 %v268, 1.442695
        %v271 = vpow.pop %v270
        %v272 = vmul.f32 %v269, 1.442695
        %v273 = vpow.pop %v272
        %v274 = vadd.f32 %v271, 2.0
        %v275 = vadd.f32 %v273, 2.0
        %v276 = vmul.f32 %v271, %v274
        %v277 = vmul.f32 %v273, %v275
        %v278 = vadd.f32 %v276, 2.0
        %v279 = vadd.f32 %v277, 2.0
        %v280 = vrcp.pop %v278
        %v281 = vrcp.pop %v279
        %v282 = vmul.f32 %v276, %v280
        %v283 = vmul.f32 %v277, %v281
        %vm284 = vcmp.gt.f32.partialorder %v252, 20.0
        %vm285 = vcmp.gt.f32.partialorder %v265, 20.0
        %v286 = vsel %vm284, 1.0, %v282
        %v287 = vsel %vm285, 1.0, %v283
        %v288 = vmul.f32 %v252, %v286
        %v289 = vmul.f32 %v265, %v287
        %290 = vst [vmem:[%s190] sm:$0xff] %v288
        %291 = vst [vmem:[%s190 + $0x8] sm:$0xff] %v289
        %s292 = sand.u32 %s96, 1
        %s293 = scalar_lea.sflag [#allocation4], %s292
        %s294 = sand.u32 %s96, 1
        %s295 = smul.addr %s294, 16
        %s296 = scalar_lea.vmem [#allocation5], %s295
        // Predicated region
        $region37: #{tpu_custom_call.1} parent=31 // pred_check
          %p297 = pneg %p106
        $region38: #{tpu_custom_call.1} parent=31 // pred_check_branch
          %299 = sbr.rel (%p297) target = $region40
        $region39: #{tpu_custom_call.1} parent=31 // pred_region
          %s300 = smul.u32 2, %s20
          %302 = vsyncadd %s293, 0
          %s303 = smul.addr %s300, 8
          %s304 = scalar_lea.hbm %s3, %s303
          %s306 = sshll.u32 %s296, 4
          %s307 = int_to_ptr.vmem [resolvable:$true] %s306
          %s308 = sshll.u32 %s304, 4
          %s309 = int_to_ptr.hbm [resolvable:$true] %s308
          %311 = dma.vmem_to_hbm [thread:$0]  %s307, 256, %s309, %s293
        $region40: #{tpu_custom_call.1} parent=31 // pred_fallthru
          _
      $region32: #{tpu_custom_call.1} parent=5 // pred_fallthru
        _
      %p312 = scmp.le.s32.totalorder 2, %s15
      // Predicated region
      $region41: #{tpu_custom_call.1} parent=5 // pred_check
        %p313 = pneg %p312
      $region42: #{tpu_custom_call.1} parent=5 // pred_check_branch
        %315 = sbr.rel (%p313) target = $region44
      $region43: #{tpu_custom_call.1} parent=5 // pred_region
        %s316 = ssub.s32 %s15, 2
        // Predicated region
        $region45: #{tpu_custom_call.1} parent=43 // pred_check
          %p317 = pneg %p112
        $region46: #{tpu_custom_call.1} parent=43 // pred_check_branch
          %319 = sbr.rel (%p317) target = $region48
        $region47: #{tpu_custom_call.1} parent=43 // pred_region
          %s320 = sand.u32 %s97, 1
          %s321 = scalar_lea.sflag [#allocation4], %s320
          %s322 = sand.u32 %s97, 1
          %s323 = smul.addr %s322, 16
          %s324 = scalar_lea.vmem [#allocation5], %s323
          %326 = dma.done %s321, 256
        $region48: #{tpu_custom_call.1} parent=43 // pred_fallthru
          _
      $region44: #{tpu_custom_call.1} parent=5 // pred_fallthru
        _
    $region6: #{tpu_custom_call.1} parent=1 // loop_footer
      %s19 = sadd.s32 1, %s15
    $region7: #{tpu_custom_call.1} parent=1 // loop_footer_branch
      %14 = sbr.rel target = $region3
    $region8: #{tpu_custom_call.1} parent=1 // loop_exit
      _
    %327 = vsyncpa [#allocation3], 1
    %s328 = scalar_lea.sflag [#allocation3], 1
    %329 = vsyncpa %s328, 1
    %330 = vsyncpa [#allocation4], 1
    %s331 = scalar_lea.sflag [#allocation4], 1
    %332 = vsyncpa %s331, 1

</llo_original>
